<compile_context>
chip_gen: v6e
topology: v6e:2x2x1
jax: 0.10.0
libtpu: 0.0.40
codegen_flags: <defaults>
</compile_context>

<pallas_src>
import functools

import jax
import jax.numpy as jnp
from jax.experimental import pallas as pl
from jax.experimental.pallas import tpu as pltpu

_MiB = 1 << 20


# ---------------------------------------------------------------------------
# Kernels
# ---------------------------------------------------------------------------
def _ann_kernel_fc0_only(x_ref, w0_ref, b0_ref, o_ref):
    # n_ANNlayers == 1: y = x @ W0^T + b0 (no dead W/b inputs streamed).
    # Cast to the compute dtype inside the kernel (free VPU op, no extra HBM pass).
    x = x_ref[...].astype(w0_ref.dtype)
    y = jnp.dot(x, w0_ref[...], preferred_element_type=jnp.float32)
    o_ref[...] = (y + b0_ref[...]).astype(o_ref.dtype)


def _ann_kernel_multi(x_ref, w0_ref, b0_ref, w_ref, b_ref, o_ref, *, n_layers):
    x = x_ref[...].astype(w0_ref.dtype)
    y = jnp.dot(x, w0_ref[...],
                preferred_element_type=jnp.float32) + b0_ref[...]
    # Hoist the resident fc weight/bias loads out of the unrolled layer loop.
    w = w_ref[...]
    b = b_ref[...]
    # extra layers: fc(dropout(relu(y))); dropout == identity in eval mode.
    for _ in range(n_layers - 1):
        h = jnp.maximum(y, 0.0).astype(w.dtype)
        y = jnp.dot(h, w, preferred_element_type=jnp.float32) + b
    o_ref[...] = y.astype(o_ref.dtype)


# ---------------------------------------------------------------------------
# Hardware detection (defensive: never crash if the query is unavailable)
# ---------------------------------------------------------------------------
def _device_kind():
    try:
        return jax.devices()[0].device_kind.lower()
    except Exception:
        return ""


def _is_v5e(kind):
    return ("v5e" in kind) or ("v5 lite" in kind) or ("v5lite" in kind)


def _has_two_cores(kind):
    # v7x (2 TC/chip) and megacore generations benefit from >=2 grid blocks.
    return ("v7" in kind) or ("v4" in kind) or ("v5p" in kind)


def _vmem_budget(kind):
    cap = None
    try:
        cap = int(pltpu.get_tpu_info().vmem_capacity_bytes)
    except Exception:
        cap = None
    if cap is None or cap <= 0:
        cap = 64 * _MiB if "v7" in kind else 128 * _MiB
    budget = (3 * cap) // 4                       # ~75% of physical
    if "v7" in kind:
        budget = min(budget, 44 * _MiB)           # 64 MiB/TC on v7x -> keep headroom
    else:
        budget = min(budget, 96 * _MiB)           # v5e/v6e: 128 MiB physical
    return budget, cap


# ---------------------------------------------------------------------------
# Tile selection: biggest row tile that fits the per-chip VMEM budget.
# ---------------------------------------------------------------------------
def _round_up(v, m):
    return ((v + m - 1) // m) * m


def _pick_tile_m(n, d_in, d_red, requested, in_itemsize, out_itemsize,
                 resident_bytes, budget_bytes):
    # Row granularity: 8 sublanes for 32-bit, 16 for 16-bit packed dtypes.
    gran = 8 * max(1, 4 // min(in_itemsize, out_itemsize))
    stream_budget = max(budget_bytes - resident_bytes, 1 << 20)
    # Streamed bytes per row: double-buffered input tile + output tile.
    per_row = 2 * (d_in * in_itemsize + d_red * out_itemsize)
    # Direct computation (no halving loop): largest multiple of gran that fits.
    fit = max(gran, (stream_budget // per_row) // gran * gran)
    req = _round_up(max(gran, min(requested, _round_up(n, gran))), gran)
    return int(max(gran, min(req, fit))), gran


# ---------------------------------------------------------------------------
# Jitted pallas wrapper (all shape/dtype/tiling decisions are static args)
# ---------------------------------------------------------------------------
@functools.partial(
    jax.jit,
    static_argnames=("n_layers", "tm", "cdt_name", "vmem_limit_bytes",
                     "single_buffer_w"))
def _ann_pallas(x, w0, b0, w, b, *, n_layers, tm, cdt_name, vmem_limit_bytes,
                single_buffer_w):
    cdt = jnp.dtype(cdt_name)
    out_dtype = x.dtype
    batch, seq, d_in = x.shape
    d_red = w0.shape[0]
    n = batch * seq

    # Stream x in its incoming dtype (no wrapper-side cast -> no extra HBM pass).
    x2 = x.reshape(n, d_in)

    # Resident weights: transpose to (in, out), cast once (tiny, folded by XLA).
    w0_t = jnp.transpose(w0).astype(cdt)
    b0_2 = b0.reshape(1, d_red).astype(jnp.float32)

    resident_kw = {"pipeline_mode": pl.Buffered(1)} if single_buffer_w else {}

    def res_spec(shape):
        # Grid-invariant block: constant index_map; single-buffered when possible.
        return pl.BlockSpec(shape, lambda i: (0, 0), **resident_kw)

    in_specs = [
        pl.BlockSpec((tm, d_in), lambda i: (i, 0)),   # x rows (streamed)
        res_spec((d_in, d_red)),                      # W0^T (resident)
        res_spec((1, d_red)),                         # b0   (resident)
    ]
    args = [x2, w0_t, b0_2]

    if n_layers > 1:
        w_t = jnp.transpose(w).astype(cdt)
        b_2 = b.reshape(1, d_red).astype(jnp.float32)
        in_specs += [res_spec((d_red, d_red)),        # W^T (resident)
                     res_spec((1, d_red))]            # b   (resident)
        args += [w_t, b_2]
        kernel = functools.partial(_ann_kernel_multi, n_layers=n_layers)
    else:
        kernel = _ann_kernel_fc0_only

    # No pre-padding: Pallas masks the ragged last block.
    grid = (pl.cdiv(n, tm),)

    out2 = pl.pallas_call(
        kernel,
        out_shape=jax.ShapeDtypeStruct((n, d_red), out_dtype),
        grid_spec=pltpu.PrefetchScalarGridSpec(
            num_scalar_prefetch=0,
            grid=grid,
            in_specs=in_specs,
            out_specs=pl.BlockSpec((tm, d_red), lambda i: (i, 0)),
        ),
        compiler_params=pltpu.CompilerParams(
            dimension_semantics=("parallel",),
            vmem_limit_bytes=vmem_limit_bytes),
    )(*args)

    return out2.reshape(batch, seq, d_red)


# ---------------------------------------------------------------------------
# Public wrapper (hardware-dependent decisions resolved at Python level)
# ---------------------------------------------------------------------------
def ann_forward(x, w0, b0, w=None, b=None, *, n_ANNlayers=1, tile_m=None,
                compute_dtype="auto"):
    """ANN forward.

    x : (batch, seq, input_size)
    w0: (reduced_size, input_size)   -- PyTorch nn.Linear layout (out, in)
    b0: (reduced_size,)
    w : (reduced_size, reduced_size) -- only required when n_ANNlayers > 1
    b : (reduced_size,)
    compute_dtype: "auto" (bf16 on v5e, else x.dtype), None (x.dtype), or a
                   dtype (e.g. jnp.bfloat16).  Accumulation is always f32 and
                   the output keeps x.dtype.
    """
    batch, seq, d_in = x.shape
    d_red = w0.shape[0]
    n = batch * seq

    kind = _device_kind()
    budget, vmem_cap = _vmem_budget(kind)

    # Resolve compute dtype.
    if isinstance(compute_dtype, str) and compute_dtype == "auto":
        cdt = jnp.dtype(jnp.bfloat16) if _is_v5e(kind) else jnp.dtype(x.dtype)
    elif compute_dtype is None:
        cdt = jnp.dtype(x.dtype)
    else:
        cdt = jnp.dtype(compute_dtype)

    in_itemsize = jnp.dtype(x.dtype).itemsize     # x streams in its own dtype
    out_itemsize = jnp.dtype(x.dtype).itemsize

    # Grid-invariant (resident) VMEM: single-buffered weights + biases.
    resident = d_in * d_red * cdt.itemsize + d_red * 4
    multi = n_ANNlayers > 1
    if multi:
        assert w is not None and b is not None, "need fc weights for n_ANNlayers > 1"
        resident += d_red * d_red * cdt.itemsize + d_red * 4

    requested = 1024 if tile_m is None else int(tile_m)   # roofline knee ~512-1024
    tm, gran = _pick_tile_m(n, d_in, d_red, requested, in_itemsize,
                            out_itemsize, resident, budget)

    # On 2-TC chips make sure the parallel grid axis has >= 2 blocks.
    if _has_two_cores(kind) and n >= 2 * gran:
        tm = max(gran, min(tm, _round_up(pl.cdiv(n, 2), gran)))

    vmem_limit = int(min(budget + 8 * _MiB, (vmem_cap * 9) // 10))

    common = dict(n_layers=n_ANNlayers, tm=tm, cdt_name=cdt.name,
                  vmem_limit_bytes=vmem_limit)
    try:
        return _ann_pallas(x, w0, b0, w, b, single_buffer_w=True, **common)
    except Exception:
        # Fallback if this JAX build rejects pl.Buffered(1) on resident inputs.
        return _ann_pallas(x, w0, b0, w, b, single_buffer_w=False, **common)


# ---------------------------------------------------------------------------
# Pure-JAX reference (PyTorch Linear layout: (out, in))
# ---------------------------------------------------------------------------
def _ann_reference(x, w0, b0, w, b, n_ANNlayers=1):
    y = jnp.einsum("bsd,rd->bsr", x, w0) + b0
    for _ in range(n_ANNlayers - 1):
        y = jnp.einsum("bsd,rd->bsr", jnp.maximum(y, 0.0), w) + b
    return y


if __name__ == "__main__":
    # Small shapes consistent with the module: batch=2, seq=8,
    # input_size=256, reduced_size=128.
    batch, seq, input_size, reduced_size = 2, 8, 256, 128

    key = jax.random.PRNGKey(0)
    k_x, k_w0, k_b0, k_w, k_b = jax.random.split(key, 5)

    x = jax.random.normal(k_x, (batch, seq, input_size), dtype=jnp.float32)
    # Deterministic synthetic params (PyTorch Linear layout: (out, in)).
    w0 = jax.random.normal(k_w0, (reduced_size, input_size), jnp.float32) * 0.02
    b0 = jax.random.normal(k_b0, (reduced_size,), jnp.float32) * 0.02
    w = jax.random.normal(k_w, (reduced_size, reduced_size), jnp.float32) * 0.02
    b = jax.random.normal(k_b, (reduced_size,), jnp.float32) * 0.02

    # 1) Module default: n_ANNlayers=1 (fc0 only), explicit f32 compute.
    out1 = jax.block_until_ready(
        ann_forward(x, w0, b0, n_ANNlayers=1, compute_dtype=jnp.float32))
    ref1 = _ann_reference(x, w0, b0, w, b, 1)
    assert out1.shape == (batch, seq, reduced_size)
    assert jnp.allclose(out1, ref1, atol=1e-4, rtol=1e-4), "mismatch (1 layer)"

    # 2) Multi-layer path exercises the fc / relu loop.
    out3 = jax.block_until_ready(
        ann_forward(x, w0, b0, w, b, n_ANNlayers=3, compute_dtype=jnp.float32))
    ref3 = _ann_reference(x, w0, b0, w, b, 3)
    assert jnp.allclose(out3, ref3, atol=1e-4, rtol=1e-4), "mismatch (3 layers)"

    # 3) Ragged row count (n=14, tile=8): Pallas masks the partial last block.
    x_r = jax.random.normal(k_x, (batch, 7, input_size), dtype=jnp.float32)
    out_r = jax.block_until_ready(
        ann_forward(x_r, w0, b0, n_ANNlayers=1, tile_m=8,
                    compute_dtype=jnp.float32))
    ref_r = _ann_reference(x_r, w0, b0, w, b, 1)
    assert out_r.shape == (batch, 7, reduced_size)
    assert jnp.allclose(out_r, ref_r, atol=1e-4, rtol=1e-4), "mismatch (ragged)"

    # 4) bf16 compute path (in-kernel cast, no extra HBM pass) + "auto" default.
    out_bf = jax.block_until_ready(
        ann_forward(x, w0, b0, n_ANNlayers=1, compute_dtype=jnp.bfloat16))
    assert jnp.allclose(out_bf, ref1, atol=5e-2, rtol=5e-2), "mismatch (bf16 path)"
    out_auto = jax.block_until_ready(ann_forward(x, w0, b0, n_ANNlayers=1))
    assert jnp.allclose(out_auto, ref1, atol=5e-2, rtol=5e-2), "mismatch (auto path)"

    print("KERNEL_OK")
</pallas_src>

<mosaic_0001>
module attributes {stable_mosaic.version = 11 : i64} {
  func.func @_ann_kernel_fc0_only(%arg0: i32, %arg1: memref<16x256xf32, #tpu.memory_space<vmem>>, %arg2: memref<256x128xf32, #tpu.memory_space<vmem>>, %arg3: memref<1x128xf32, #tpu.memory_space<vmem>>, %arg4: memref<16x128xf32, #tpu.memory_space<vmem>>) attributes {dimension_semantics = [#tpu.dimension_semantics<parallel>], iteration_bounds = array<i64: 1>, scalar_prefetch = 0 : i64, scratch_operands = 0 : i64, tpu.core_type = #tpu.core_type<tc>, window_params = [{transform_indices = @transform_0, window_bounds = array<i64: 16, 256>}, {pipeline_mode = #tpu.pipeline_mode<synchronous>, transform_indices = @transform_1, window_bounds = array<i64: 256, 128>}, {pipeline_mode = #tpu.pipeline_mode<synchronous>, transform_indices = @transform_2, window_bounds = array<i64: 1, 128>}, {transform_indices = @transform_3, window_bounds = array<i64: 16, 128>}]} {
    %c0 = arith.constant 0 : index
    %c0_0 = arith.constant 0 : index
    %0 = vector.load %arg1[%c0, %c0_0] : memref<16x256xf32, #tpu.memory_space<vmem>>, vector<16x256xf32>
    %c0_1 = arith.constant 0 : index
    %c0_2 = arith.constant 0 : index
    %1 = vector.load %arg2[%c0_1, %c0_2] : memref<256x128xf32, #tpu.memory_space<vmem>>, vector<256x128xf32>
    %cst = arith.constant dense<0.000000e+00> : vector<16x128xf32>
    %2 = tpu.matmul %0, %1, %cst {dimension_numbers = #tpu.dot_dimension_numbers<[1], [0], [0], [1], [0, 0, 1, 1], [], []>} : vector<16x256xf32>, vector<256x128xf32>, vector<16x128xf32> -> vector<16x128xf32>
    %c0_3 = arith.constant 0 : index
    %c0_4 = arith.constant 0 : index
    %3 = vector.load %arg3[%c0_3, %c0_4] : memref<1x128xf32, #tpu.memory_space<vmem>>, vector<1x128xf32>
    %4 = vector.broadcast %3 : vector<1x128xf32> to vector<16x128xf32>
    %5 = arith.addf %2, %4 : vector<16x128xf32>
    %c0_5 = arith.constant 0 : index
    %c0_6 = arith.constant 0 : index
    %6 = vector.load %arg4[%c0_5, %c0_6] : memref<16x128xf32, #tpu.memory_space<vmem>>, vector<16x128xf32>
    tpu.vector_store %arg4[%c0_5, %c0_6], %5 {strides = array<i32>} : memref<16x128xf32, #tpu.memory_space<vmem>>, vector<16x128xf32>,
    return
  }
  func.func @transform_0(%arg0: i32) -> (i32, i32) {
    %c0_i32 = arith.constant 0 : i32
    %c0_i32_0 = arith.constant 0 : i32
    return %arg0, %c0_i32 : i32, i32
  }
  func.func @transform_1(%arg0: i32) -> (i32, i32) {
    %c0_i32 = arith.constant 0 : i32
    %c0_i32_0 = arith.constant 0 : i32
    %c0_i32_1 = arith.constant 0 : i32
    return %c0_i32, %c0_i32_0 : i32, i32
  }
  func.func @transform_2(%arg0: i32) -> (i32, i32) {
    %c0_i32 = arith.constant 0 : i32
    %c0_i32_0 = arith.constant 0 : i32
    %c0_i32_1 = arith.constant 0 : i32
    return %c0_i32, %c0_i32_0 : i32, i32
  }
  func.func @transform_3(%arg0: i32) -> (i32, i32) {
    %c0_i32 = arith.constant 0 : i32
    %c0_i32_0 = arith.constant 0 : i32
    return %arg0, %c0_i32 : i32, i32
  }
}

module attributes {stable_mosaic.version = 11 : i64} {
  func.func @_ann_kernel_fc0_only(%arg0: i32, %arg1: memref<16x256xf32, #tpu.memory_space<vmem>>, %arg2: memref<256x128xf32, #tpu.memory_space<vmem>>, %arg3: memref<1x128xf32, #tpu.memory_space<vmem>>, %arg4: memref<16x128xf32, #tpu.memory_space<vmem>>) attributes {dimension_semantics = [#tpu.dimension_semantics<parallel>], iteration_bounds = array<i64: 1>, scalar_prefetch = 0 : i64, scratch_operands = 0 : i64, tpu.core_type = #tpu.core_type<tc>, window_params = [{transform_indices = @transform_0, window_bounds = array<i64: 16, 256>}, {pipeline_mode = #tpu.pipeline_mode<synchronous>, transform_indices = @transform_1, window_bounds = array<i64: 256, 128>}, {pipeline_mode = #tpu.pipeline_mode<synchronous>, transform_indices = @transform_2, window_bounds = array<i64: 1, 128>}, {transform_indices = @transform_3, window_bounds = array<i64: 16, 128>}]} {
    %c0 = arith.constant 0 : index
    %c0_0 = arith.constant 0 : index
    %0 = vector.load %arg1[%c0, %c0_0] : memref<16x256xf32, #tpu.memory_space<vmem>>, vector<16x256xf32>
    %c0_1 = arith.constant 0 : index
    %c0_2 = arith.constant 0 : index
    %1 = vector.load %arg2[%c0_1, %c0_2] : memref<256x128xf32, #tpu.memory_space<vmem>>, vector<256x128xf32>
    %cst = arith.constant dense<0.000000e+00> : vector<16x128xf32>
    %2 = tpu.matmul %0, %1, %cst {dimension_numbers = #tpu.dot_dimension_numbers<[1], [0], [0], [1], [0, 0, 1, 1], [], []>} : vector<16x256xf32>, vector<256x128xf32>, vector<16x128xf32> -> vector<16x128xf32>
    %c0_3 = arith.constant 0 : index
    %c0_4 = arith.constant 0 : index
    %3 = vector.load %arg3[%c0_3, %c0_4] : memref<1x128xf32, #tpu.memory_space<vmem>>, vector<1x128xf32>
    %4 = vector.broadcast %3 : vector<1x128xf32> to vector<16x128xf32>
    %5 = arith.addf %2, %4 : vector<16x128xf32>
    %c0_5 = arith.constant 0 : index
    %c0_6 = arith.constant 0 : index
    %6 = vector.load %arg4[%c0_5, %c0_6] : memref<16x128xf32, #tpu.memory_space<vmem>>, vector<16x128xf32>
    tpu.vector_store %arg4[%c0_5, %c0_6], %5 {strides = array<i32>} : memref<16x128xf32, #tpu.memory_space<vmem>>, vector<16x128xf32>,
    return
  }
  func.func @transform_0(%arg0: i32) -> (i32, i32) {
    %c0_i32 = arith.constant 0 : i32
    %c0_i32_0 = arith.constant 0 : i32
    return %arg0, %c0_i32 : i32, i32
  }
  func.func @transform_1(%arg0: i32) -> (i32, i32) {
    %c0_i32 = arith.constant 0 : i32
    %c0_i32_0 = arith.constant 0 : i32
    %c0_i32_1 = arith.constant 0 : i32
    return %c0_i32, %c0_i32_0 : i32, i32
  }
  func.func @transform_2(%arg0: i32) -> (i32, i32) {
    %c0_i32 = arith.constant 0 : i32
    %c0_i32_0 = arith.constant 0 : i32
    %c0_i32_1 = arith.constant 0 : i32
    return %c0_i32, %c0_i32_0 : i32, i32
  }
  func.func @transform_3(%arg0: i32) -> (i32, i32) {
    %c0_i32 = arith.constant 0 : i32
    %c0_i32_0 = arith.constant 0 : i32
    return %arg0, %c0_i32 : i32, i32
  }
}

</mosaic_0001>

<llo_original>
// kernel: _ann_pallas.1
$region0: #{_ann_pallas.1}
  #allocation0 [shape = 'u32[]', space=smem, size = 0x4, offset = 0x4, fixed_abs, tag = 'smem constant byte address 0x4 - core index']
  #allocation1 [shape = 'u32[144,128]{1,0:T(1,128)}', space=vmem, size = 0x12000, scoped, tag = 'internal scratch']
  %s0 = inlined_call_operand.vmem [shape: f32[16,256], index: 0, kind: input, shape index: {}]
  %s1 = inlined_call_operand.vmem [shape: f32[256,128], index: 1, kind: input, shape index: {}]
  %s2 = inlined_call_operand.vmem [shape: f32[1,128], index: 2, kind: input, shape index: {}]
  %s3 = inlined_call_operand.hbm [shape: f32[16,128], index: 3, kind: output, shape index: {}]
  %s4 = sld [smem:[#allocation0]]
  $region22: #{_ann_pallas.1} parent=0
    _
  %s6 = ssub.s32 1, %s4
  %s7 = scalar_select 0, %s6, %s4
  $region1: #{_ann_pallas.1} parent=0
    #allocation2 [shape = 'u8[8192]{0}', space=vmem, size = 0x2000, scoped, tag = 'output window, operand 0, single buffered']
    #allocation3 [shape = 's32[1]{0}', space=sflag, size = 0x4, scoped, tag = 'scoped memory for _ann_pallas.1']
    %8 = vsyncpa [#allocation3], 0
    // Predicated region
    $region2: #{_ann_pallas.1} parent=1 // pred_check
      _
    $region3: #{_ann_pallas.1} parent=1 // pred_check_branch
      %10 = sbr.rel (0) target = $region5
    $region4: #{_ann_pallas.1} parent=1 // pred_region
      _
    $region5: #{_ann_pallas.1} parent=1 // pred_fallthru
      _
    // Predicated region
    $region6: #{_ann_pallas.1} parent=1 // pred_check
      _
    $region7: #{_ann_pallas.1} parent=1 // pred_check_branch
      %12 = sbr.rel (0) target = $region9
    $region8: #{_ann_pallas.1} parent=1 // pred_region
      _
    $region9: #{_ann_pallas.1} parent=1 // pred_fallthru
      _
    // Predicated region
    $region10: #{_ann_pallas.1} parent=1 // pred_check
      _
    $region11: #{_ann_pallas.1} parent=1 // pred_check_branch
      %14 = sbr.rel (0) target = $region13
    $region12: #{_ann_pallas.1} parent=1 // pred_region
      _
    $region13: #{_ann_pallas.1} parent=1 // pred_fallthru
      _
    %v15 = vld [vmem:[%s0] sm:$0xff]
    %v16 = vld [vmem:[%s0 + $0x8] sm:$0xff]
    %v17 = vld [vmem:[%s0 + $0x10] sm:$0xff]
    %v18 = vld [vmem:[%s0 + $0x18] sm:$0xff]
    %v19 = vld [vmem:[%s1] sm:$0xff]
    %v20 = vld [vmem:[%s1 + $0x8] sm:$0xff]
    %v21 = vld [vmem:[%s1 + $0x10] sm:$0xff]
    %v22 = vld [vmem:[%s1 + $0x18] sm:$0xff]
    %v23 = vld [vmem:[%s1 + $0x20] sm:$0xff]
    %v24 = vld [vmem:[%s1 + $0x28] sm:$0xff]
    %v25 = vld [vmem:[%s1 + $0x30] sm:$0xff]
    %v26 = vld [vmem:[%s1 + $0x38] sm:$0xff]
    %v27 = vld [vmem:[%s1 + $0x40] sm:$0xff]
    %v28 = vld [vmem:[%s1 + $0x48] sm:$0xff]
    %v29 = vld [vmem:[%s1 + $0x50] sm:$0xff]
    %v30 = vld [vmem:[%s1 + $0x58] sm:$0xff]
    %v31 = vld [vmem:[%s1 + $0x60] sm:$0xff]
    %v32 = vld [vmem:[%s1 + $0x68] sm:$0xff]
    %v33 = vld [vmem:[%s1 + $0x70] sm:$0xff]
    %v34 = vld [vmem:[%s1 + $0x78] sm:$0xff]
    %v35 = vld [vmem:[%s1 + $0x80] sm:$0xff]
    %v36 = vld [vmem:[%s1 + $0x88] sm:$0xff]
    %v37 = vld [vmem:[%s1 + $0x90] sm:$0xff]
    %v38 = vld [vmem:[%s1 + $0x98] sm:$0xff]
    %v39 = vld [vmem:[%s1 + $0xa0] sm:$0xff]
    %v40 = vld [vmem:[%s1 + $0xa8] sm:$0xff]
    %v41 = vld [vmem:[%s1 + $0xb0] sm:$0xff]
    %v42 = vld [vmem:[%s1 + $0xb8] sm:$0xff]
    %v43 = vld [vmem:[%s1 + $0xc0] sm:$0xff]
    %v44 = vld [vmem:[%s1 + $0xc8] sm:$0xff]
    %v45 = vld [vmem:[%s1 + $0xd0] sm:$0xff]
    %v46 = vld [vmem:[%s1 + $0xd8] sm:$0xff]
    %v47 = vld [vmem:[%s1 + $0xe0] sm:$0xff]
    %v48 = vld [vmem:[%s1 + $0xe8] sm:$0xff]
    %v49 = vld [vmem:[%s1 + $0xf0] sm:$0xff]
    %v50 = vld [vmem:[%s1 + $0xf8] sm:$0xff]
    %v51 = vld [vmem:[%s2] sm:$0x1]
    %v53 = vlaneseq
    %v54 = vshrl.u32 %v53, 7
    %v55 = vsub.s32 0, %v54
    %v56 = vrot.slane %v51, %v55
    %58 = vmatprep.subr.mxu0 0.0
    %59 = vmatpush1.msra.mxu0 %v34
    %60 = vmatprep.subr.mxu0 0.0
    %61 = vmatpush1.msra.mxu0 %v33
    %62 = vmatprep.subr.mxu0 0.0
    %63 = vmatpush1.msra.mxu0 %v32
    %64 = vmatprep.subr.mxu0 0.0
    %65 = vmatpush1.msra.mxu0 %v31
    %66 = vmatprep.subr.mxu0 0.0
    %67 = vmatpush1.msra.mxu0 %v30
    %68 = vmatprep.subr.mxu0 0.0
    %69 = vmatpush1.msra.mxu0 %v29
    %70 = vmatprep.subr.mxu0 0.0
    %71 = vmatpush1.msra.mxu0 %v28
    %72 = vmatprep.subr.mxu0 0.0
    %73 = vmatpush1.msra.mxu0 %v27
    %74 = vmatprep.subr.mxu0 0.0
    %75 = vmatpush1.msra.mxu0 %v26
    %76 = vmatprep.subr.mxu0 0.0
    %77 = vmatpush1.msra.mxu0 %v25
    %78 = vmatprep.subr.mxu0 0.0
    %79 = vmatpush1.msra.mxu0 %v24
    %80 = vmatprep.subr.mxu0 0.0
    %81 = vmatpush1.msra.mxu0 %v23
    %82 = vmatprep.subr.mxu0 0.0
    %83 = vmatpush1.msra.mxu0 %v22
    %84 = vmatprep.subr.mxu0 0.0
    %85 = vmatpush1.msra.mxu0 %v21
    %86 = vmatprep.subr.mxu0 0.0
    %87 = vmatpush1.msra.mxu0 %v20
    %88 = vmatprep.subr.mxu0 0.0
    %89 = vmatpush1.msra.mxu0 %v19
    %90 = vmatprep.subr.mxu0 0.0
    %91 = vmatpush2.msra.mxu0 %v50
    %92 = vmatprep.subr.mxu0 0.0
    %93 = vmatpush2.msra.mxu0 %v49
    %94 = vmatprep.subr.mxu0 0.0
    %95 = vmatpush2.msra.mxu0 %v48
    %96 = vmatprep.subr.mxu0 0.0
    %97 = vmatpush2.msra.mxu0 %v47
    %98 = vmatprep.subr.mxu0 0.0
    %99 = vmatpush2.msra.mxu0 %v46
    %100 = vmatprep.subr.mxu0 0.0
    %101 = vmatpush2.msra.mxu0 %v45
    %102 = vmatprep.subr.mxu0 0.0
    %103 = vmatpush2.msra.mxu0 %v44
    %104 = vmatprep.subr.mxu0 0.0
    %105 = vmatpush2.msra.mxu0 %v43
    %106 = vmatprep.subr.mxu0 0.0
    %107 = vmatpush2.msra.mxu0 %v42
    %108 = vmatprep.subr.mxu0 0.0
    %109 = vmatpush2.msra.mxu0 %v41
    %110 = vmatprep.subr.mxu0 0.0
    %111 = vmatpush2.msra.mxu0 %v40
    %112 = vmatprep.subr.mxu0 0.0
    %113 = vmatpush2.msra.mxu0 %v39
    %114 = vmatprep.subr.mxu0 0.0
    %115 = vmatpush2.msra.mxu0 %v38
    %116 = vmatprep.subr.mxu0 0.0
    %117 = vmatpush2.msra.mxu0 %v37
    %118 = vmatprep.subr.mxu0 0.0
    %119 = vmatpush2.msra.mxu0 %v36
    %120 = vmatprep.subr.mxu0 0.0
    %121 = vmatpush2.msra.mxu0 %v35
    %122 = vmatprep.mubr.f32.mxu0 %v16
    %123 = vmatmul.mubr.f32.gmra.mxu0 %v15
    %v124 = vpop.f32.mrf.mxu0
    %v125 = vadd.f32 %v56, %v124
    %v126 = vpop.f32.mrf.mxu0
    %127 = vmatprep.mubr.f32.mxu0 %v18
    %128 = vmatmul.mubr.f32.gmra.mxu0 %v17
    %v129 = vpop.f32.mrf.mxu0
    %v130 = vadd.f32 %v56, %v129
    %v131 = vpop.f32.mrf.mxu0
    %132 = vdwg.mxu0
    %133 = vst [vmem:[#allocation2] sm:$0xff] %v125
    %134 = vst [vmem:[#allocation2 + $0x8] sm:$0xff] %v130
    // Predicated region
    $region14: #{_ann_pallas.1} parent=1 // pred_check
      _
    $region15: #{_ann_pallas.1} parent=1 // pred_check_branch
      %136 = sbr.rel (0) target = $region17
    $region16: #{_ann_pallas.1} parent=1 // pred_region
      %s138 = ssub.s32 256, 256
      %139 = vsyncadd [#allocation3], %s138
      %s140 = sshll.u32 [#allocation2], 4
      %s141 = int_to_ptr.vmem [resolvable:$true] %s140
      %146 = dma.vmem_to_hbm [thread:$0]  %s141, 256, %s3, [#allocation3], 128, 128, 8
    $region17: #{_ann_pallas.1} parent=1 // pred_fallthru
      _
    // Predicated region
    $region18: #{_ann_pallas.1} parent=1 // pred_check
      _
    $region19: #{_ann_pallas.1} parent=1 // pred_check_branch
      %148 = sbr.rel (0) target = $region21
    $region20: #{_ann_pallas.1} parent=1 // pred_region
      %149 = dma.done [#allocation3], 256
    $region21: #{_ann_pallas.1} parent=1 // pred_fallthru
      _
    %150 = vsyncpa [#allocation3], 1

// kernel: _ann_pallas.1
$region0: #{_ann_pallas.1}
  #allocation0 [shape = 'u32[]', space=smem, size = 0x4, offset = 0x4, fixed_abs, tag = 'smem constant byte address 0x4 - core index']
  #allocation1 [shape = 'u32[144,128]{1,0:T(1,128)}', space=vmem, size = 0x12000, scoped, tag = 'internal scratch']
  %s0 = inlined_call_operand.vmem [shape: f32[16,256], index: 0, kind: input, shape index: {}]
  %s1 = inlined_call_operand.vmem [shape: f32[256,128], index: 1, kind: input, shape index: {}]
  %s2 = inlined_call_operand.vmem [shape: f32[1,128], index: 2, kind: input, shape index: {}]
  %s3 = inlined_call_operand.hbm [shape: f32[16,128], index: 3, kind: output, shape index: {}]
  %s4 = sld [smem:[#allocation0]]
  $region22: #{_ann_pallas.1} parent=0
    _
  %s6 = ssub.s32 1, %s4
  %s7 = scalar_select 0, %s6, %s4
  $region1: #{_ann_pallas.1} parent=0
    #allocation2 [shape = 'u8[8192]{0}', space=vmem, size = 0x2000, scoped, tag = 'output window, operand 0, single buffered']
    #allocation3 [shape = 's32[1]{0}', space=sflag, size = 0x4, scoped, tag = 'scoped memory for _ann_pallas.1']
    %8 = vsyncpa [#allocation3], 0
    // Predicated region
    $region2: #{_ann_pallas.1} parent=1 // pred_check
      _
    $region3: #{_ann_pallas.1} parent=1 // pred_check_branch
      %10 = sbr.rel (0) target = $region5
    $region4: #{_ann_pallas.1} parent=1 // pred_region
      _
    $region5: #{_ann_pallas.1} parent=1 // pred_fallthru
      _
    // Predicated region
    $region6: #{_ann_pallas.1} parent=1 // pred_check
      _
    $region7: #{_ann_pallas.1} parent=1 // pred_check_branch
      %12 = sbr.rel (0) target = $region9
    $region8: #{_ann_pallas.1} parent=1 // pred_region
      _
    $region9: #{_ann_pallas.1} parent=1 // pred_fallthru
      _
    // Predicated region
    $region10: #{_ann_pallas.1} parent=1 // pred_check
      _
    $region11: #{_ann_pallas.1} parent=1 // pred_check_branch
      %14 = sbr.rel (0) target = $region13
    $region12: #{_ann_pallas.1} parent=1 // pred_region
      _
    $region13: #{_ann_pallas.1} parent=1 // pred_fallthru
      _
    %v15 = vld [vmem:[%s0] sm:$0xff]
    %v16 = vld [vmem:[%s0 + $0x8] sm:$0xff]
    %v17 = vld [vmem:[%s0 + $0x10] sm:$0xff]
    %v18 = vld [vmem:[%s0 + $0x18] sm:$0xff]
    %v19 = vld [vmem:[%s1] sm:$0xff]
    %v20 = vld [vmem:[%s1 + $0x8] sm:$0xff]
    %v21 = vld [vmem:[%s1 + $0x10] sm:$0xff]
    %v22 = vld [vmem:[%s1 + $0x18] sm:$0xff]
    %v23 = vld [vmem:[%s1 + $0x20] sm:$0xff]
    %v24 = vld [vmem:[%s1 + $0x28] sm:$0xff]
    %v25 = vld [vmem:[%s1 + $0x30] sm:$0xff]
    %v26 = vld [vmem:[%s1 + $0x38] sm:$0xff]
    %v27 = vld [vmem:[%s1 + $0x40] sm:$0xff]
    %v28 = vld [vmem:[%s1 + $0x48] sm:$0xff]
    %v29 = vld [vmem:[%s1 + $0x50] sm:$0xff]
    %v30 = vld [vmem:[%s1 + $0x58] sm:$0xff]
    %v31 = vld [vmem:[%s1 + $0x60] sm:$0xff]
    %v32 = vld [vmem:[%s1 + $0x68] sm:$0xff]
    %v33 = vld [vmem:[%s1 + $0x70] sm:$0xff]
    %v34 = vld [vmem:[%s1 + $0x78] sm:$0xff]
    %v35 = vld [vmem:[%s1 + $0x80] sm:$0xff]
    %v36 = vld [vmem:[%s1 + $0x88] sm:$0xff]
    %v37 = vld [vmem:[%s1 + $0x90] sm:$0xff]
    %v38 = vld [vmem:[%s1 + $0x98] sm:$0xff]
    %v39 = vld [vmem:[%s1 + $0xa0] sm:$0xff]
    %v40 = vld [vmem:[%s1 + $0xa8] sm:$0xff]
    %v41 = vld [vmem:[%s1 + $0xb0] sm:$0xff]
    %v42 = vld [vmem:[%s1 + $0xb8] sm:$0xff]
    %v43 = vld [vmem:[%s1 + $0xc0] sm:$0xff]
    %v44 = vld [vmem:[%s1 + $0xc8] sm:$0xff]
    %v45 = vld [vmem:[%s1 + $0xd0] sm:$0xff]
    %v46 = vld [vmem:[%s1 + $0xd8] sm:$0xff]
    %v47 = vld [vmem:[%s1 + $0xe0] sm:$0xff]
    %v48 = vld [vmem:[%s1 + $0xe8] sm:$0xff]
    %v49 = vld [vmem:[%s1 + $0xf0] sm:$0xff]
    %v50 = vld [vmem:[%s1 + $0xf8] sm:$0xff]
    %v51 = vld [vmem:[%s2] sm:$0x1]
    %v53 = vlaneseq
    %v54 = vshrl.u32 %v53, 7
    %v55 = vsub.s32 0, %v54
    %v56 = vrot.slane %v51, %v55
    %58 = vmatprep.subr.mxu0 0.0
    %59 = vmatpush1.msra.mxu0 %v34
    %60 = vmatprep.subr.mxu0 0.0
    %61 = vmatpush1.msra.mxu0 %v33
    %62 = vmatprep.subr.mxu0 0.0
    %63 = vmatpush1.msra.mxu0 %v32
    %64 = vmatprep.subr.mxu0 0.0
    %65 = vmatpush1.msra.mxu0 %v31
    %66 = vmatprep.subr.mxu0 0.0
    %67 = vmatpush1.msra.mxu0 %v30
    %68 = vmatprep.subr.mxu0 0.0
    %69 = vmatpush1.msra.mxu0 %v29
    %70 = vmatprep.subr.mxu0 0.0
    %71 = vmatpush1.msra.mxu0 %v28
    %72 = vmatprep.subr.mxu0 0.0
    %73 = vmatpush1.msra.mxu0 %v27
    %74 = vmatprep.subr.mxu0 0.0
    %75 = vmatpush1.msra.mxu0 %v26
    %76 = vmatprep.subr.mxu0 0.0
    %77 = vmatpush1.msra.mxu0 %v25
    %78 = vmatprep.subr.mxu0 0.0
    %79 = vmatpush1.msra.mxu0 %v24
    %80 = vmatprep.subr.mxu0 0.0
    %81 = vmatpush1.msra.mxu0 %v23
    %82 = vmatprep.subr.mxu0 0.0
    %83 = vmatpush1.msra.mxu0 %v22
    %84 = vmatprep.subr.mxu0 0.0
    %85 = vmatpush1.msra.mxu0 %v21
    %86 = vmatprep.subr.mxu0 0.0
    %87 = vmatpush1.msra.mxu0 %v20
    %88 = vmatprep.subr.mxu0 0.0
    %89 = vmatpush1.msra.mxu0 %v19
    %90 = vmatprep.subr.mxu0 0.0
    %91 = vmatpush2.msra.mxu0 %v50
    %92 = vmatprep.subr.mxu0 0.0
    %93 = vmatpush2.msra.mxu0 %v49
    %94 = vmatprep.subr.mxu0 0.0
    %95 = vmatpush2.msra.mxu0 %v48
    %96 = vmatprep.subr.mxu0 0.0
    %97 = vmatpush2.msra.mxu0 %v47
    %98 = vmatprep.subr.mxu0 0.0
    %99 = vmatpush2.msra.mxu0 %v46
    %100 = vmatprep.subr.mxu0 0.0
    %101 = vmatpush2.msra.mxu0 %v45
    %102 = vmatprep.subr.mxu0 0.0
    %103 = vmatpush2.msra.mxu0 %v44
    %104 = vmatprep.subr.mxu0 0.0
    %105 = vmatpush2.msra.mxu0 %v43
    %106 = vmatprep.subr.mxu0 0.0
    %107 = vmatpush2.msra.mxu0 %v42
    %108 = vmatprep.subr.mxu0 0.0
    %109 = vmatpush2.msra.mxu0 %v41
    %110 = vmatprep.subr.mxu0 0.0
    %111 = vmatpush2.msra.mxu0 %v40
    %112 = vmatprep.subr.mxu0 0.0
    %113 = vmatpush2.msra.mxu0 %v39
    %114 = vmatprep.subr.mxu0 0.0
    %115 = vmatpush2.msra.mxu0 %v38
    %116 = vmatprep.subr.mxu0 0.0
    %117 = vmatpush2.msra.mxu0 %v37
    %118 = vmatprep.subr.mxu0 0.0
    %119 = vmatpush2.msra.mxu0 %v36
    %120 = vmatprep.subr.mxu0 0.0
    %121 = vmatpush2.msra.mxu0 %v35
    %122 = vmatprep.mubr.f32.mxu0 %v16
    %123 = vmatmul.mubr.f32.gmra.mxu0 %v15
    %v124 = vpop.f32.mrf.mxu0
    %v125 = vadd.f32 %v56, %v124
    %v126 = vpop.f32.mrf.mxu0
    %127 = vmatprep.mubr.f32.mxu0 %v18
    %128 = vmatmul.mubr.f32.gmra.mxu0 %v17
    %v129 = vpop.f32.mrf.mxu0
    %v130 = vadd.f32 %v56, %v129
    %v131 = vpop.f32.mrf.mxu0
    %132 = vdwg.mxu0
    %133 = vst [vmem:[#allocation2] sm:$0xff] %v125
    %134 = vst [vmem:[#allocation2 + $0x8] sm:$0xff] %v130
    // Predicated region
    $region14: #{_ann_pallas.1} parent=1 // pred_check
      _
    $region15: #{_ann_pallas.1} parent=1 // pred_check_branch
      %136 = sbr.rel (0) target = $region17
    $region16: #{_ann_pallas.1} parent=1 // pred_region
      %s138 = ssub.s32 256, 256
      %139 = vsyncadd [#allocation3], %s138
      %s140 = sshll.u32 [#allocation2], 4
      %s141 = int_to_ptr.vmem [resolvable:$true] %s140
      %146 = dma.vmem_to_hbm [thread:$0]  %s141, 256, %s3, [#allocation3], 128, 128, 8
    $region17: #{_ann_pallas.1} parent=1 // pred_fallthru
      _
    // Predicated region
    $region18: #{_ann_pallas.1} parent=1 // pred_check
      _
    $region19: #{_ann_pallas.1} parent=1 // pred_check_branch
      %148 = sbr.rel (0) target = $region21
    $region20: #{_ann_pallas.1} parent=1 // pred_region
      %149 = dma.done [#allocation3], 256
    $region21: #{_ann_pallas.1} parent=1 // pred_fallthru
      _
    %150 = vsyncpa [#allocation3], 1

</llo_original>
